<compile_context>
chip_gen: v5e
topology: v5e:2x2
jax: 0.10.0
libtpu: 0.0.40
codegen_flags: <defaults>
</compile_context>

<pallas_src>
import functools

import jax
import jax.numpy as jnp
from jax import lax
from jax.experimental import pallas as pl
from jax.experimental.pallas import tpu as pltpu
import numpy as np


# ----------------------------------------------------------------------------
# Fused kernel: (depthwise+pointwise+BN1+ReLU) + residual -> conv2+BN2 -> ReLU.
# One grid step = one image; the intermediate h never leaves VMEM.
# ----------------------------------------------------------------------------
def fused_block_kernel(xf_ref, col_ref, w1_ref, b1_ref, w2_ref, b2_ref,
                       out_ref, hbuf, *, W):
    # xf_ref : (Cin,  HW+2*(W+1)) zero lane-padded flattened input
    # col_ref: (1, HW) int32      column index j = p % W (precomputed; no vector idiv)
    # w1_ref : (2*Cout, 9*Cin)    [dw*pw*bn1-scale ; match_channels at centre tap]
    # b1_ref : (Cout, 1)
    # w2_ref : (Cout, 9*Cout)     conv2 * bn2-scale (tap-major K)
    # b2_ref : (Cout, 1)          c2_b*s2 + shift2 + residual bias
    # out_ref: (Cout, HW)         NCHW-flattened output (lane-dense)
    # hbuf   : (Cout, HW+2*(W+1)) VMEM scratch: lane-padded h for stage-2 taps
    Cout, HW = out_ref.shape
    pad = W + 1

    # Column-boundary masks; row boundaries are covered by the zero lane padding.
    col = col_ref[...]
    col_ok = {0: col >= 1, 1: None, 2: col < W - 1}        # keyed by dx

    def gather_taps(src_ref):
        # Tap-major (9*C, HW) im2col from 9 static lane-offset slices.
        pieces = []
        for dy in range(3):
            for dx in range(3):
                off = dy * W + dx                          # = (dy-1)*W+(dx-1)+pad
                v = src_ref[:, off:off + HW]
                m = col_ok[dx]
                if m is not None:
                    v = jnp.where(m, v, 0.0)
                pieces.append(v)
        return jnp.concatenate(pieces, axis=0)

    # Stage 1 (+ residual): ONE MXU matmul -> [h_pre ; res], each (Cout, HW).
    cols1 = gather_taps(xf_ref)                                        # (9*Cin, HW)
    hr = jnp.dot(w1_ref[...], cols1, preferred_element_type=jnp.float32)
    h = jnp.maximum(hr[:Cout, :] + b1_ref[...], 0.0)
    res = hr[Cout:, :]

    # Lane-padded h for stage 2: only the two small halo strips are zeroed.
    halo = jnp.zeros((Cout, pad), jnp.float32)
    hbuf[:, :pad] = halo
    hbuf[:, pad + HW:] = halo
    hbuf[:, pad:pad + HW] = h

    # Stage 2: conv2 * BN2 as ONE matmul, then bias + residual + ReLU.
    cols2 = gather_taps(hbuf)                                          # (9*Cout, HW)
    y = jnp.dot(w2_ref[...], cols2, preferred_element_type=jnp.float32)
    out_ref[...] = jnp.maximum(y + b2_ref[...] + res, 0.0)


# ----------------------------------------------------------------------------
# Wrapper: layout prep + BN / depthwise / residual folding (one-time XLA).
# ----------------------------------------------------------------------------
@jax.jit
def depthwise_separable_residual_block(x_nchw, params):
    N, Cin, H, W = x_nchw.shape
    Cout = params["pw_b"].shape[0]
    HW = H * W
    pad = W + 1
    eps = 1e-5

    # NCHW already has channels-in-sublane / HW-in-lane after a free reshape;
    # lane-pad by W+1 zeros per side so every 3x3 tap is a static lane slice.
    xflat = x_nchw.reshape(N, Cin, HW).astype(jnp.float32)
    xfp = jnp.pad(xflat, ((0, 0), (0, 0), (pad, pad)))
    colidx = (jnp.arange(HW, dtype=jnp.int32) % W)[None, :]

    # BN eval-mode scale/shift.
    s1 = params["bn1_gamma"] / jnp.sqrt(params["bn1_var"] + eps)
    sh1 = params["bn1_beta"] - params["bn1_mean"] * s1
    s2 = params["bn2_gamma"] / jnp.sqrt(params["bn2_var"] + eps)
    sh2 = params["bn2_beta"] - params["bn2_mean"] * s2

    # Fold depthwise 3x3 into pointwise 1x1 and BN1 into the result (exact, f32).
    dw9 = params["dw_w"].reshape(Cin, 9).T                             # (9, Cin)
    pw_mat = params["pw_w"][:, :, 0, 0].T                              # (Cin, Cout)
    w1 = (dw9[:, :, None] * pw_mat[None, :, :]).reshape(9 * Cin, Cout)
    w1 = w1 * s1[None, :]
    b1 = (params["dw_b"] @ pw_mat + params["pw_b"]) * s1 + sh1         # (Cout,)

    # match_channels 1x1 (identity only valid when in_channels == out_channels).
    if params.get("m_w") is not None:
        m_mat = params["m_w"][:, :, 0, 0].T.astype(jnp.float32)        # (Cin, Cout)
        m_b = params["m_b"].astype(jnp.float32)
    else:
        assert Cin == Cout, "identity residual requires in_channels == out_channels"
        m_mat = jnp.eye(Cin, dtype=jnp.float32)
        m_b = jnp.zeros((Cout,), jnp.float32)

    # Residual merged into stage 1: x is exactly the centre tap (k = 4), so the
    # extra Cout output rows only have weights in im2col rows [4*Cin, 5*Cin).
    w1aug = jnp.zeros((9 * Cin, 2 * Cout), jnp.float32)
    w1aug = w1aug.at[:, :Cout].set(w1)
    w1aug = w1aug.at[4 * Cin:5 * Cin, Cout:].set(m_mat)
    w1aug_t = w1aug.T                                                  # (2*Cout, 9*Cin)

    # conv2 with BN2 folded; residual bias folded into the epilogue bias.
    w2 = jnp.transpose(params["c2_w"], (2, 3, 1, 0)).reshape(9 * Cout, Cout)
    w2_t = (w2 * s2[None, :]).T                                        # (Cout, 9*Cout)
    b1c = b1.reshape(Cout, 1).astype(jnp.float32)
    b2c = (params["c2_b"] * s2 + sh2 + m_b).reshape(Cout, 1).astype(jnp.float32)

    out_flat = pl.pallas_call(
        functools.partial(fused_block_kernel, W=W),
        grid=(N,),
        in_specs=[
            pl.BlockSpec((None, Cin, HW + 2 * pad), lambda n: (n, 0, 0)),
            pl.BlockSpec((1, HW), lambda n: (0, 0)),
            pl.BlockSpec((2 * Cout, 9 * Cin), lambda n: (0, 0)),
            pl.BlockSpec((Cout, 1), lambda n: (0, 0)),
            pl.BlockSpec((Cout, 9 * Cout), lambda n: (0, 0)),
            pl.BlockSpec((Cout, 1), lambda n: (0, 0)),
        ],
        out_specs=pl.BlockSpec((None, Cout, HW), lambda n: (n, 0, 0)),
        out_shape=jax.ShapeDtypeStruct((N, Cout, HW), jnp.float32),
        scratch_shapes=[pltpu.VMEM((Cout, HW + 2 * pad), jnp.float32)],
        compiler_params=pltpu.CompilerParams(
            dimension_semantics=("parallel",),       # >= 2 steps keeps both v7x TCs busy
            vmem_limit_bytes=32 * 1024 * 1024),
    )(xfp, colidx, w1aug_t, b1c, w2_t, b2c)

    # (N, Cout, H*W) is already NCHW-flattened -> free reshape, no transpose.
    return out_flat.reshape(N, Cout, H, W)


# ----------------------------------------------------------------------------
# Pure-JAX reference (NCHW, same math) for correctness checking.
# ----------------------------------------------------------------------------
def reference_forward(x, p):
    dn = ("NCHW", "OIHW", "NCHW")
    Cin = x.shape[1]
    eps = 1e-5

    y = lax.conv_general_dilated(x, p["dw_w"], (1, 1), ((1, 1), (1, 1)),
                                 dimension_numbers=dn, feature_group_count=Cin)
    y = y + p["dw_b"].reshape(1, -1, 1, 1)
    y = lax.conv_general_dilated(y, p["pw_w"], (1, 1), "VALID", dimension_numbers=dn)
    y = y + p["pw_b"].reshape(1, -1, 1, 1)
    s1 = p["bn1_gamma"] / jnp.sqrt(p["bn1_var"] + eps)
    y = (y - p["bn1_mean"].reshape(1, -1, 1, 1)) * s1.reshape(1, -1, 1, 1) \
        + p["bn1_beta"].reshape(1, -1, 1, 1)
    y = jnp.maximum(y, 0.0)

    res = lax.conv_general_dilated(x, p["m_w"], (1, 1), "VALID", dimension_numbers=dn)
    res = res + p["m_b"].reshape(1, -1, 1, 1)

    y = lax.conv_general_dilated(y, p["c2_w"], (1, 1), ((1, 1), (1, 1)),
                                 dimension_numbers=dn)
    y = y + p["c2_b"].reshape(1, -1, 1, 1)
    s2 = p["bn2_gamma"] / jnp.sqrt(p["bn2_var"] + eps)
    y = (y - p["bn2_mean"].reshape(1, -1, 1, 1)) * s2.reshape(1, -1, 1, 1) \
        + p["bn2_beta"].reshape(1, -1, 1, 1)
    y = y + res
    return jnp.maximum(y, 0.0)


def init_params(key, cin, cout):
    ks = jax.random.split(key, 8)
    return {
        # depthwise: Conv2d(cin, cin, 3, groups=cin) -> weight (cin, 1, 3, 3)
        "dw_w": 0.2 * jax.random.normal(ks[0], (cin, 1, 3, 3), jnp.float32),
        "dw_b": 0.1 * jax.random.normal(ks[1], (cin,), jnp.float32),
        # pointwise: Conv2d(cin, cout, 1) -> weight (cout, cin, 1, 1)
        "pw_w": 0.2 * jax.random.normal(ks[2], (cout, cin, 1, 1), jnp.float32),
        "pw_b": 0.1 * jax.random.normal(ks[3], (cout,), jnp.float32),
        # conv2: Conv2d(cout, cout, 3)
        "c2_w": 0.2 * jax.random.normal(ks[4], (cout, cout, 3, 3), jnp.float32),
        "c2_b": 0.1 * jax.random.normal(ks[5], (cout,), jnp.float32),
        # match_channels: Conv2d(cin, cout, 1)
        "m_w": 0.2 * jax.random.normal(ks[6], (cout, cin, 1, 1), jnp.float32),
        "m_b": 0.1 * jax.random.normal(ks[7], (cout,), jnp.float32),
        # BatchNorm (eval mode: running stats).
        "bn1_gamma": jnp.linspace(0.9, 1.1, cout, dtype=jnp.float32),
        "bn1_beta": jnp.linspace(-0.05, 0.05, cout, dtype=jnp.float32),
        "bn1_mean": jnp.zeros((cout,), jnp.float32),
        "bn1_var": jnp.ones((cout,), jnp.float32),
        "bn2_gamma": jnp.linspace(1.1, 0.9, cout, dtype=jnp.float32),
        "bn2_beta": jnp.linspace(0.05, -0.05, cout, dtype=jnp.float32),
        "bn2_mean": jnp.zeros((cout,), jnp.float32),
        "bn2_var": jnp.ones((cout,), jnp.float32),
    }


if __name__ == "__main__":
    N, Cin, Cout, H, W = 2, 4, 8, 16, 16
    key = jax.random.PRNGKey(0)
    kx, kp = jax.random.split(key)
    x = jax.random.normal(kx, (N, Cin, H, W), jnp.float32)
    params = init_params(kp, Cin, Cout)

    out = depthwise_separable_residual_block(x, params)
    out = jax.block_until_ready(out)

    ref = jax.block_until_ready(reference_forward(x, params))
    np.testing.assert_allclose(np.asarray(out), np.asarray(ref),
                               rtol=1e-3, atol=1e-3)
    assert out.shape == (N, Cout, H, W)
    print("KERNEL_OK")
</pallas_src>

<mosaic_0001>
module attributes {stable_mosaic.version = 11 : i64} {
  func.func @fused_block_kernel(%arg0: i32, %arg1: memref<1x4x290xf32, #tpu.memory_space<vmem>>, %arg2: memref<1x256xi32, #tpu.memory_space<vmem>>, %arg3: memref<16x36xf32, #tpu.memory_space<vmem>>, %arg4: memref<8x1xf32, #tpu.memory_space<vmem>>, %arg5: memref<8x72xf32, #tpu.memory_space<vmem>>, %arg6: memref<8x1xf32, #tpu.memory_space<vmem>>, %arg7: memref<1x8x256xf32, #tpu.memory_space<vmem>>, %arg8: memref<8x290xf32, #tpu.memory_space<vmem>>) attributes {dimension_semantics = [#tpu.dimension_semantics<parallel>], iteration_bounds = array<i64: 2>, scalar_prefetch = 0 : i64, scratch_operands = 1 : i64, tpu.core_type = #tpu.core_type<tc>, window_params = [{transform_indices = @transform_0, window_bounds = array<i64: 1, 4, 290>}, {pipeline_mode = #tpu.pipeline_mode<synchronous>, transform_indices = @transform_1, window_bounds = array<i64: 1, 256>}, {pipeline_mode = #tpu.pipeline_mode<synchronous>, transform_indices = @transform_2, window_bounds = array<i64: 16, 36>}, {pipeline_mode = #tpu.pipeline_mode<synchronous>, transform_indices = @transform_3, window_bounds = array<i64: 8, 1>}, {pipeline_mode = #tpu.pipeline_mode<synchronous>, transform_indices = @transform_4, window_bounds = array<i64: 8, 72>}, {pipeline_mode = #tpu.pipeline_mode<synchronous>, transform_indices = @transform_5, window_bounds = array<i64: 8, 1>}, {transform_indices = @transform_6, window_bounds = array<i64: 1, 8, 256>}]} {
    %c0 = arith.constant 0 : index
    %c0_0 = arith.constant 0 : index
    %0 = vector.load %arg2[%c0, %c0_0] : memref<1x256xi32, #tpu.memory_space<vmem>>, vector<1x256xi32>
    %c1_i32 = arith.constant 1 : i32
    %1 = vector.broadcast %c1_i32 : i32 to vector<1x256xi32>
    %2 = arith.cmpi sge, %0, %1 : vector<1x256xi32>
    %c15_i32 = arith.constant 15 : i32
    %3 = vector.broadcast %c15_i32 : i32 to vector<1x256xi32>
    %4 = arith.cmpi slt, %0, %3 : vector<1x256xi32>
    %c0_1 = arith.constant 0 : index
    %c0_2 = arith.constant 0 : index
    %c0_3 = arith.constant 0 : index
    %5 = vector.load %arg1[%c0_1, %c0_2, %c0_3] : memref<1x4x290xf32, #tpu.memory_space<vmem>>, vector<1x4x256xf32>
    %6 = vector.shape_cast %5 : vector<1x4x256xf32> to vector<4x256xf32>
    %cst = arith.constant 0.000000e+00 : f32
    %7 = vector.shape_cast %2 : vector<1x256xi1> to vector<1x256xi1>
    %8 = vector.broadcast %7 : vector<1x256xi1> to vector<4x256xi1>
    %9 = vector.broadcast %cst : f32 to vector<4x256xf32>
    %10 = arith.select %8, %6, %9 : vector<4x256xi1>, vector<4x256xf32>
    %c0_4 = arith.constant 0 : index
    %c0_5 = arith.constant 0 : index
    %c1 = arith.constant 1 : index
    %11 = vector.load %arg1[%c0_4, %c0_5, %c1] : memref<1x4x290xf32, #tpu.memory_space<vmem>>, vector<1x4x256xf32>
    %12 = vector.shape_cast %11 : vector<1x4x256xf32> to vector<4x256xf32>
    %c0_6 = arith.constant 0 : index
    %c0_7 = arith.constant 0 : index
    %c2 = arith.constant 2 : index
    %13 = vector.load %arg1[%c0_6, %c0_7, %c2] : memref<1x4x290xf32, #tpu.memory_space<vmem>>, vector<1x4x256xf32>
    %14 = vector.shape_cast %13 : vector<1x4x256xf32> to vector<4x256xf32>
    %cst_8 = arith.constant 0.000000e+00 : f32
    %15 = vector.shape_cast %4 : vector<1x256xi1> to vector<1x256xi1>
    %16 = vector.broadcast %15 : vector<1x256xi1> to vector<4x256xi1>
    %17 = vector.broadcast %cst_8 : f32 to vector<4x256xf32>
    %18 = arith.select %16, %14, %17 : vector<4x256xi1>, vector<4x256xf32>
    %c0_9 = arith.constant 0 : index
    %c0_10 = arith.constant 0 : index
    %c16 = arith.constant 16 : index
    %19 = vector.load %arg1[%c0_9, %c0_10, %c16] : memref<1x4x290xf32, #tpu.memory_space<vmem>>, vector<1x4x256xf32>
    %20 = vector.shape_cast %19 : vector<1x4x256xf32> to vector<4x256xf32>
    %cst_11 = arith.constant 0.000000e+00 : f32
    %21 = vector.shape_cast %2 : vector<1x256xi1> to vector<1x256xi1>
    %22 = vector.broadcast %21 : vector<1x256xi1> to vector<4x256xi1>
    %23 = vector.broadcast %cst_11 : f32 to vector<4x256xf32>
    %24 = arith.select %22, %20, %23 : vector<4x256xi1>, vector<4x256xf32>
    %c0_12 = arith.constant 0 : index
    %c0_13 = arith.constant 0 : index
    %c17 = arith.constant 17 : index
    %25 = vector.load %arg1[%c0_12, %c0_13, %c17] : memref<1x4x290xf32, #tpu.memory_space<vmem>>, vector<1x4x256xf32>
    %26 = vector.shape_cast %25 : vector<1x4x256xf32> to vector<4x256xf32>
    %c0_14 = arith.constant 0 : index
    %c0_15 = arith.constant 0 : index
    %c18 = arith.constant 18 : index
    %27 = vector.load %arg1[%c0_14, %c0_15, %c18] : memref<1x4x290xf32, #tpu.memory_space<vmem>>, vector<1x4x256xf32>
    %28 = vector.shape_cast %27 : vector<1x4x256xf32> to vector<4x256xf32>
    %cst_16 = arith.constant 0.000000e+00 : f32
    %29 = vector.shape_cast %4 : vector<1x256xi1> to vector<1x256xi1>
    %30 = vector.broadcast %29 : vector<1x256xi1> to vector<4x256xi1>
    %31 = vector.broadcast %cst_16 : f32 to vector<4x256xf32>
    %32 = arith.select %30, %28, %31 : vector<4x256xi1>, vector<4x256xf32>
    %c0_17 = arith.constant 0 : index
    %c0_18 = arith.constant 0 : index
    %c32 = arith.constant 32 : index
    %33 = vector.load %arg1[%c0_17, %c0_18, %c32] : memref<1x4x290xf32, #tpu.memory_space<vmem>>, vector<1x4x256xf32>
    %34 = vector.shape_cast %33 : vector<1x4x256xf32> to vector<4x256xf32>
    %cst_19 = arith.constant 0.000000e+00 : f32
    %35 = vector.shape_cast %2 : vector<1x256xi1> to vector<1x256xi1>
    %36 = vector.broadcast %35 : vector<1x256xi1> to vector<4x256xi1>
    %37 = vector.broadcast %cst_19 : f32 to vector<4x256xf32>
    %38 = arith.select %36, %34, %37 : vector<4x256xi1>, vector<4x256xf32>
    %c0_20 = arith.constant 0 : index
    %c0_21 = arith.constant 0 : index
    %c33 = arith.constant 33 : index
    %39 = vector.load %arg1[%c0_20, %c0_21, %c33] : memref<1x4x290xf32, #tpu.memory_space<vmem>>, vector<1x4x256xf32>
    %40 = vector.shape_cast %39 : vector<1x4x256xf32> to vector<4x256xf32>
    %c0_22 = arith.constant 0 : index
    %c0_23 = arith.constant 0 : index
    %c34 = arith.constant 34 : index
    %41 = vector.load %arg1[%c0_22, %c0_23, %c34] : memref<1x4x290xf32, #tpu.memory_space<vmem>>, vector<1x4x256xf32>
    %42 = vector.shape_cast %41 : vector<1x4x256xf32> to vector<4x256xf32>
    %cst_24 = arith.constant 0.000000e+00 : f32
    %43 = vector.shape_cast %4 : vector<1x256xi1> to vector<1x256xi1>
    %44 = vector.broadcast %43 : vector<1x256xi1> to vector<4x256xi1>
    %45 = vector.broadcast %cst_24 : f32 to vector<4x256xf32>
    %46 = arith.select %44, %42, %45 : vector<4x256xi1>, vector<4x256xf32>
    %47 = tpu.concatenate %10, %12, %18, %24, %26, %32, %38, %40, %46 in 0 : vector<4x256xf32>, vector<4x256xf32>, vector<4x256xf32>, vector<4x256xf32>, vector<4x256xf32>, vector<4x256xf32>, vector<4x256xf32>, vector<4x256xf32>, vector<4x256xf32> -> vector<36x256xf32>
    %c0_25 = arith.constant 0 : index
    %c0_26 = arith.constant 0 : index
    %48 = vector.load %arg3[%c0_25, %c0_26] : memref<16x36xf32, #tpu.memory_space<vmem>>, vector<16x36xf32>
    %cst_27 = arith.constant dense<0.000000e+00> : vector<16x256xf32>
    %49 = tpu.matmul %48, %47, %cst_27 {dimension_numbers = #tpu.dot_dimension_numbers<[1], [0], [0], [1], [0, 0, 1, 1], [], []>} : vector<16x36xf32>, vector<36x256xf32>, vector<16x256xf32> -> vector<16x256xf32>
    %50 = vector.extract_strided_slice %49 {offsets = [0, 0], sizes = [8, 256], strides = [1, 1]} : vector<16x256xf32> to vector<8x256xf32>
    %c0_28 = arith.constant 0 : index
    %c0_29 = arith.constant 0 : index
    %51 = vector.load %arg4[%c0_28, %c0_29] : memref<8x1xf32, #tpu.memory_space<vmem>>, vector<8x1xf32>
    %52 = vector.broadcast %51 : vector<8x1xf32> to vector<8x256xf32>
    %53 = arith.addf %50, %52 : vector<8x256xf32>
    %cst_30 = arith.constant 0.000000e+00 : f32
    %54 = vector.broadcast %cst_30 : f32 to vector<8x256xf32>
    %55 = arith.maximumf %53, %54 : vector<8x256xf32>
    %56 = vector.extract_strided_slice %49 {offsets = [8, 0], sizes = [8, 256], strides = [1, 1]} : vector<16x256xf32> to vector<8x256xf32>
    %cst_31 = arith.constant 0.000000e+00 : f32
    %57 = vector.broadcast %cst_31 : f32 to vector<8x17xf32>
    %c0_32 = arith.constant 0 : index
    %c0_33 = arith.constant 0 : index
    %58 = vector.load %arg8[%c0_32, %c0_33] : memref<8x290xf32, #tpu.memory_space<vmem>>, vector<8x17xf32>
    tpu.vector_store %arg8[%c0_32, %c0_33], %57 {strides = array<i32>} : memref<8x290xf32, #tpu.memory_space<vmem>>, vector<8x17xf32>,
    %c0_34 = arith.constant 0 : index
    %c273 = arith.constant 273 : index
    %59 = vector.load %arg8[%c0_34, %c273] : memref<8x290xf32, #tpu.memory_space<vmem>>, vector<8x17xf32>
    tpu.vector_store %arg8[%c0_34, %c273], %57 {strides = array<i32>} : memref<8x290xf32, #tpu.memory_space<vmem>>, vector<8x17xf32>,
    %c0_35 = arith.constant 0 : index
    %c17_36 = arith.constant 17 : index
    %60 = vector.load %arg8[%c0_35, %c17_36] : memref<8x290xf32, #tpu.memory_space<vmem>>, vector<8x256xf32>
    tpu.vector_store %arg8[%c0_35, %c17_36], %55 {strides = array<i32>} : memref<8x290xf32, #tpu.memory_space<vmem>>, vector<8x256xf32>,
    %c0_37 = arith.constant 0 : index
    %c0_38 = arith.constant 0 : index
    %61 = vector.load %arg8[%c0_37, %c0_38] : memref<8x290xf32, #tpu.memory_space<vmem>>, vector<8x256xf32>
    %cst_39 = arith.constant 0.000000e+00 : f32
    %62 = vector.shape_cast %2 : vector<1x256xi1> to vector<1x256xi1>
    %63 = vector.broadcast %62 : vector<1x256xi1> to vector<8x256xi1>
    %64 = vector.broadcast %cst_39 : f32 to vector<8x256xf32>
    %65 = arith.select %63, %61, %64 : vector<8x256xi1>, vector<8x256xf32>
    %c0_40 = arith.constant 0 : index
    %c1_41 = arith.constant 1 : index
    %66 = vector.load %arg8[%c0_40, %c1_41] : memref<8x290xf32, #tpu.memory_space<vmem>>, vector<8x256xf32>
    %c0_42 = arith.constant 0 : index
    %c2_43 = arith.constant 2 : index
    %67 = vector.load %arg8[%c0_42, %c2_43] : memref<8x290xf32, #tpu.memory_space<vmem>>, vector<8x256xf32>
    %cst_44 = arith.constant 0.000000e+00 : f32
    %68 = vector.shape_cast %4 : vector<1x256xi1> to vector<1x256xi1>
    %69 = vector.broadcast %68 : vector<1x256xi1> to vector<8x256xi1>
    %70 = vector.broadcast %cst_44 : f32 to vector<8x256xf32>
    %71 = arith.select %69, %67, %70 : vector<8x256xi1>, vector<8x256xf32>
    %c0_45 = arith.constant 0 : index
    %c16_46 = arith.constant 16 : index
    %72 = vector.load %arg8[%c0_45, %c16_46] : memref<8x290xf32, #tpu.memory_space<vmem>>, vector<8x256xf32>
    %cst_47 = arith.constant 0.000000e+00 : f32
    %73 = vector.shape_cast %2 : vector<1x256xi1> to vector<1x256xi1>
    %74 = vector.broadcast %73 : vector<1x256xi1> to vector<8x256xi1>
    %75 = vector.broadcast %cst_47 : f32 to vector<8x256xf32>
    %76 = arith.select %74, %72, %75 : vector<8x256xi1>, vector<8x256xf32>
    %c0_48 = arith.constant 0 : index
    %c17_49 = arith.constant 17 : index
    %77 = vector.load %arg8[%c0_48, %c17_49] : memref<8x290xf32, #tpu.memory_space<vmem>>, vector<8x256xf32>
    %c0_50 = arith.constant 0 : index
    %c18_51 = arith.constant 18 : index
    %78 = vector.load %arg8[%c0_50, %c18_51] : memref<8x290xf32, #tpu.memory_space<vmem>>, vector<8x256xf32>
    %cst_52 = arith.constant 0.000000e+00 : f32
    %79 = vector.shape_cast %4 : vector<1x256xi1> to vector<1x256xi1>
    %80 = vector.broadcast %79 : vector<1x256xi1> to vector<8x256xi1>
    %81 = vector.broadcast %cst_52 : f32 to vector<8x256xf32>
    %82 = arith.select %80, %78, %81 : vector<8x256xi1>, vector<8x256xf32>
    %c0_53 = arith.constant 0 : index
    %c32_54 = arith.constant 32 : index
    %83 = vector.load %arg8[%c0_53, %c32_54] : memref<8x290xf32, #tpu.memory_space<vmem>>, vector<8x256xf32>
    %cst_55 = arith.constant 0.000000e+00 : f32
    %84 = vector.shape_cast %2 : vector<1x256xi1> to vector<1x256xi1>
    %85 = vector.broadcast %84 : vector<1x256xi1> to vector<8x256xi1>
    %86 = vector.broadcast %cst_55 : f32 to vector<8x256xf32>
    %87 = arith.select %85, %83, %86 : vector<8x256xi1>, vector<8x256xf32>
    %c0_56 = arith.constant 0 : index
    %c33_57 = arith.constant 33 : index
    %88 = vector.load %arg8[%c0_56, %c33_57] : memref<8x290xf32, #tpu.memory_space<vmem>>, vector<8x256xf32>
    %c0_58 = arith.constant 0 : index
    %c34_59 = arith.constant 34 : index
    %89 = vector.load %arg8[%c0_58, %c34_59] : memref<8x290xf32, #tpu.memory_space<vmem>>, vector<8x256xf32>
    %cst_60 = arith.constant 0.000000e+00 : f32
    %90 = vector.shape_cast %4 : vector<1x256xi1> to vector<1x256xi1>
    %91 = vector.broadcast %90 : vector<1x256xi1> to vector<8x256xi1>
    %92 = vector.broadcast %cst_60 : f32 to vector<8x256xf32>
    %93 = arith.select %91, %89, %92 : vector<8x256xi1>, vector<8x256xf32>
    %94 = tpu.concatenate %65, %66, %71, %76, %77, %82, %87, %88, %93 in 0 : vector<8x256xf32>, vector<8x256xf32>, vector<8x256xf32>, vector<8x256xf32>, vector<8x256xf32>, vector<8x256xf32>, vector<8x256xf32>, vector<8x256xf32>, vector<8x256xf32> -> vector<72x256xf32>
    %c0_61 = arith.constant 0 : index
    %c0_62 = arith.constant 0 : index
    %95 = vector.load %arg5[%c0_61, %c0_62] : memref<8x72xf32, #tpu.memory_space<vmem>>, vector<8x72xf32>
    %cst_63 = arith.constant dense<0.000000e+00> : vector<8x256xf32>
    %96 = tpu.matmul %95, %94, %cst_63 {dimension_numbers = #tpu.dot_dimension_numbers<[1], [0], [0], [1], [0, 0, 1, 1], [], []>} : vector<8x72xf32>, vector<72x256xf32>, vector<8x256xf32> -> vector<8x256xf32>
    %c0_64 = arith.constant 0 : index
    %c0_65 = arith.constant 0 : index
    %97 = vector.load %arg6[%c0_64, %c0_65] : memref<8x1xf32, #tpu.memory_space<vmem>>, vector<8x1xf32>
    %98 = vector.broadcast %97 : vector<8x1xf32> to vector<8x256xf32>
    %99 = arith.addf %96, %98 : vector<8x256xf32>
    %100 = arith.addf %99, %56 : vector<8x256xf32>
    %cst_66 = arith.constant 0.000000e+00 : f32
    %101 = vector.broadcast %cst_66 : f32 to vector<8x256xf32>
    %102 = arith.maximumf %100, %101 : vector<8x256xf32>
    %c0_67 = arith.constant 0 : index
    %c0_68 = arith.constant 0 : index
    %c0_69 = arith.constant 0 : index
    %103 = vector.load %arg7[%c0_67, %c0_68, %c0_69] : memref<1x8x256xf32, #tpu.memory_space<vmem>>, vector<1x8x256xf32>
    %104 = vector.shape_cast %103 : vector<1x8x256xf32> to vector<8x256xf32>
    %105 = vector.shape_cast %102 : vector<8x256xf32> to vector<1x8x256xf32>
    tpu.vector_store %arg7[%c0_67, %c0_68, %c0_69], %105 {strides = array<i32>} : memref<1x8x256xf32, #tpu.memory_space<vmem>>, vector<1x8x256xf32>,
    return
  }
  func.func @transform_0(%arg0: i32) -> (i32, i32, i32) {
    %c0_i32 = arith.constant 0 : i32
    %c0_i32_0 = arith.constant 0 : i32
    %c0_i32_1 = arith.constant 0 : i32
    return %arg0, %c0_i32, %c0_i32_0 : i32, i32, i32
  }
  func.func @transform_1(%arg0: i32) -> (i32, i32) {
    %c0_i32 = arith.constant 0 : i32
    %c0_i32_0 = arith.constant 0 : i32
    %c0_i32_1 = arith.constant 0 : i32
    return %c0_i32, %c0_i32_0 : i32, i32
  }
  func.func @transform_2(%arg0: i32) -> (i32, i32) {
    %c0_i32 = arith.constant 0 : i32
    %c0_i32_0 = arith.constant 0 : i32
    %c0_i32_1 = arith.constant 0 : i32
    return %c0_i32, %c0_i32_0 : i32, i32
  }
  func.func @transform_3(%arg0: i32) -> (i32, i32) {
    %c0_i32 = arith.constant 0 : i32
    %c0_i32_0 = arith.constant 0 : i32
    %c0_i32_1 = arith.constant 0 : i32
    return %c0_i32, %c0_i32_0 : i32, i32
  }
  func.func @transform_4(%arg0: i32) -> (i32, i32) {
    %c0_i32 = arith.constant 0 : i32
    %c0_i32_0 = arith.constant 0 : i32
    %c0_i32_1 = arith.constant 0 : i32
    return %c0_i32, %c0_i32_0 : i32, i32
  }
  func.func @transform_5(%arg0: i32) -> (i32, i32) {
    %c0_i32 = arith.constant 0 : i32
    %c0_i32_0 = arith.constant 0 : i32
    %c0_i32_1 = arith.constant 0 : i32
    return %c0_i32, %c0_i32_0 : i32, i32
  }
  func.func @transform_6(%arg0: i32) -> (i32, i32, i32) {
    %c0_i32 = arith.constant 0 : i32
    %c0_i32_0 = arith.constant 0 : i32
    %c0_i32_1 = arith.constant 0 : i32
    return %arg0, %c0_i32, %c0_i32_0 : i32, i32, i32
  }
}

</mosaic_0001>

<llo_original>
// kernel: depthwise_separable_residual_block.1
$region0: #{depthwise_separable_residual_block.1}
  #allocation0 [shape = 'u32[]', space=smem, size = 0x4, offset = 0x4, fixed_abs, tag = 'smem constant byte address 0x4 - core index']
  #allocation1 [shape = 'u32[72,128]{1,0:T(1,128)}', space=vmem, size = 0x9000, scoped, tag = 'internal scratch']
  #allocation2 [shape = 'f32[8,290]{1,0:T(8,128)}', space=vmem, size = 0x3000, scoped, tag = 'scratch operand']
  %s0 = inlined_call_operand.vmem [shape: f32[2,4,290], index: 0, kind: input, shape index: {}]
  %s1 = inlined_call_operand.vmem [shape: s32[1,256], index: 1, kind: input, shape index: {}]
  %s2 = inlined_call_operand.vmem [shape: f32[16,36], index: 2, kind: input, shape index: {}]
  %s3 = inlined_call_operand.vmem [shape: f32[8,1], index: 3, kind: input, shape index: {}]
  %s4 = inlined_call_operand.vmem [shape: f32[8,72], index: 4, kind: input, shape index: {}]
  %s5 = inlined_call_operand.vmem [shape: f32[8,1], index: 5, kind: input, shape index: {}]
  %s6 = inlined_call_operand.vmem [shape: f32[2,8,256], index: 6, kind: output, shape index: {}]
  %s7 = sld [smem:[#allocation0]]
  $region57: #{depthwise_separable_residual_block.1} parent=0
    _
  %s9 = ssub.s32 1, %s7
  %s10 = scalar_select 0, %s9, %s7
  loop: start=0, step=1, limit=4
  $region2: #{depthwise_separable_residual_block.1} parent=0 // loop_pre_header
    _
  $region3: #{depthwise_separable_residual_block.1} parent=0 // loop_header
    %s12 = sphi 0, %s16
    %p13 = scmp.ge.s32.totalorder %s12, 4
    %s22 = sphi 0, %s24
    %s25 = sphi 0, %s22
    %s26 = sphi 0, %s25
    %s42 = sphi 0, %s26
    %s46 = sphi 0, %s46
    %s48 = sphi 0, %s46
    %s49 = sphi 0, %s48
    %s63 = sphi 0, %s49
    %s67 = sphi 0, %s67
    %s69 = sphi 0, %s67
    %s70 = sphi 0, %s69
    %s84 = sphi 0, %s70
    %s88 = sphi 0, %s88
    %s90 = sphi 0, %s88
    %s91 = sphi 0, %s90
    %s105 = sphi 0, %s91
    %s109 = sphi 0, %s109
    %s111 = sphi 0, %s109
    %s112 = sphi 0, %s111
    %s126 = sphi 0, %s112
    %s130 = sphi 0, %s130
    %s132 = sphi 0, %s130
    %s133 = sphi 0, %s132
    %s147 = sphi 0, %s133
    %s153 = sphi 0, %s155
    %s156 = sphi 0, %s153
    %s157 = sphi 0, %s156
    %s173 = sphi 0, %s157
  $region4: #{depthwise_separable_residual_block.1} parent=0 // loop_header_branch
    %15 = sbr.rel (%p13) target = $region8
  $region5: #{depthwise_separable_residual_block.1} parent=0 // loop_body
    %s17 = ssub.s32 %s12, 1
    %s18 = ssub.s32 %s12, 2
    %s19 = sadd.s32 %s12, 1
    %s20 = ssub.s32 %s12, %s19
    %p21 = scmp.eq.s32.totalorder %s20, 0
    %s23 = sadd.s32 %s22, 1
    %s24 = scalar_select %p21, %s22, %s23
    %p27 = pneg %p21
    %p28 = scmp.eq.s32.totalorder %s12, 1
    %p29 = por %p27, %p28
    %p30 = scmp.ne.s32.totalorder %s22, %s25
    %p31 = scmp.eq.s32.totalorder %s12, 0
    %p32 = por %p30, %p31
    %p33 = scmp.ne.s32.totalorder %s22, %s25
    %p34 = scmp.eq.s32.totalorder %s17, 1
    %p35 = por %p33, %p34
    %p36 = scmp.ne.s32.totalorder %s25, %s26
    %p37 = scmp.eq.s32.totalorder %s17, 0
    %p38 = por %p36, %p37
    %p39 = scmp.ne.s32.totalorder %s25, %s26
    %p40 = scmp.eq.s32.totalorder %s18, 1
    %p41 = por %p39, %p40
    %p43 = scmp.ne.s32.totalorder %s26, %s42
    %p44 = scmp.eq.s32.totalorder %s18, 0
    %p45 = por %p43, %p44
    %s47 = sadd.s32 %s46, 1
    %p50 = scmp.eq.s32.totalorder %s12, 1
    %p51 = scmp.ne.s32.totalorder %s46, %s48
    %p52 = scmp.eq.s32.totalorder %s12, 0
    %p53 = por %p51, %p52
    %p54 = scmp.ne.s32.totalorder %s46, %s48
    %p55 = scmp.eq.s32.totalorder %s17, 1
    %p56 = por %p54, %p55
    %p57 = scmp.ne.s32.totalorder %s48, %s49
    %p58 = scmp.eq.s32.totalorder %s17, 0
    %p59 = por %p57, %p58
    %p60 = scmp.ne.s32.totalorder %s48, %s49
    %p61 = scmp.eq.s32.totalorder %s18, 1
    %p62 = por %p60, %p61
    %p64 = scmp.ne.s32.totalorder %s49, %s63
    %p65 = scmp.eq.s32.totalorder %s18, 0
    %p66 = por %p64, %p65
    %s68 = sadd.s32 %s67, 1
    %p71 = scmp.eq.s32.totalorder %s12, 1
    %p72 = scmp.ne.s32.totalorder %s67, %s69
    %p73 = scmp.eq.s32.totalorder %s12, 0
    %p74 = por %p72, %p73
    %p75 = scmp.ne.s32.totalorder %s67, %s69
    %p76 = scmp.eq.s32.totalorder %s17, 1
    %p77 = por %p75, %p76
    %p78 = scmp.ne.s32.totalorder %s69, %s70
    %p79 = scmp.eq.s32.totalorder %s17, 0
    %p80 = por %p78, %p79
    %p81 = scmp.ne.s32.totalorder %s69, %s70
    %p82 = scmp.eq.s32.totalorder %s18, 1
    %p83 = por %p81, %p82
    %p85 = scmp.ne.s32.totalorder %s70, %s84
    %p86 = scmp.eq.s32.totalorder %s18, 0
    %p87 = por %p85, %p86
    %s89 = sadd.s32 %s88, 1
    %p92 = scmp.eq.s32.totalorder %s12, 1
    %p93 = scmp.ne.s32.totalorder %s88, %s90
    %p94 = scmp.eq.s32.totalorder %s12, 0
    %p95 = por %p93, %p94
    %p96 = scmp.ne.s32.totalorder %s88, %s90
    %p97 = scmp.eq.s32.totalorder %s17, 1
    %p98 = por %p96, %p97
    %p99 = scmp.ne.s32.totalorder %s90, %s91
    %p100 = scmp.eq.s32.totalorder %s17, 0
    %p101 = por %p99, %p100
    %p102 = scmp.ne.s32.totalorder %s90, %s91
    %p103 = scmp.eq.s32.totalorder %s18, 1
    %p104 = por %p102, %p103
    %p106 = scmp.ne.s32.totalorder %s91, %s105
    %p107 = scmp.eq.s32.totalorder %s18, 0
    %p108 = por %p106, %p107
    %s110 = sadd.s32 %s109, 1
    %p113 = scmp.eq.s32.totalorder %s12, 1
    %p114 = scmp.ne.s32.totalorder %s109, %s111
    %p115 = scmp.eq.s32.totalorder %s12, 0
    %p116 = por %p114, %p115
    %p117 = scmp.ne.s32.totalorder %s109, %s111
    %p118 = scmp.eq.s32.totalorder %s17, 1
    %p119 = por %p117, %p118
    %p120 = scmp.ne.s32.totalorder %s111, %s112
    %p121 = scmp.eq.s32.totalorder %s17, 0
    %p122 = por %p120, %p121
    %p123 = scmp.ne.s32.totalorder %s111, %s112
    %p124 = scmp.eq.s32.totalorder %s18, 1
    %p125 = por %p123, %p124
    %p127 = scmp.ne.s32.totalorder %s112, %s126
    %p128 = scmp.eq.s32.totalorder %s18, 0
    %p129 = por %p127, %p128
    %s131 = sadd.s32 %s130, 1
    %p134 = scmp.eq.s32.totalorder %s12, 1
    %p135 = scmp.ne.s32.totalorder %s130, %s132
    %p136 = scmp.eq.s32.totalorder %s12, 0
    %p137 = por %p135, %p136
    %p138 = scmp.ne.s32.totalorder %s130, %s132
    %p139 = scmp.eq.s32.totalorder %s17, 1
    %p140 = por %p138, %p139
    %p141 = scmp.ne.s32.totalorder %s132, %s133
    %p142 = scmp.eq.s32.totalorder %s17, 0
    %p143 = por %p141, %p142
    %p144 = scmp.ne.s32.totalorder %s132, %s133
    %p145 = scmp.eq.s32.totalorder %s18, 1
    %p146 = por %p144, %p145
    %p148 = scmp.ne.s32.totalorder %s133, %s147
    %p149 = scmp.eq.s32.totalorder %s18, 0
    %p150 = por %p148, %p149
    %s151 = ssub.s32 %s12, %s19
    %p152 = scmp.eq.s32.totalorder %s151, 0
    %s154 = sadd.s32 %s153, 1
    %s155 = scalar_select %p152, %s153, %s154
    %p158 = pneg %p152
    %p159 = scmp.eq.s32.totalorder %s12, 1
    %p160 = por %p158, %p159
    %p161 = scmp.ne.s32.totalorder %s153, %s156
    %p162 = scmp.eq.s32.totalorder %s12, 0
    %p163 = por %p161, %p162
    %p164 = scmp.ne.s32.totalorder %s153, %s156
    %p165 = scmp.eq.s32.totalorder %s17, 1
    %p166 = por %p164, %p165
    %p167 = scmp.ne.s32.totalorder %s156, %s157
    %p168 = scmp.eq.s32.totalorder %s17, 0
    %p169 = por %p167, %p168
    %p170 = scmp.ne.s32.totalorder %s156, %s157
    %p171 = scmp.eq.s32.totalorder %s18, 1
    %p172 = por %p170, %p171
    %p174 = scmp.ne.s32.totalorder %s157, %s173
    %p175 = scmp.eq.s32.totalorder %s18, 0
    %p176 = por %p174, %p175
    %p177 = scmp.le.s32.totalorder 1, %s12
    %p178 = scmp.lt.s32.totalorder %s12, 3
    %p179 = pnand %p177, %p178
    %p180 = pneg %p179
    // Predicated region
    $region9: #{depthwise_separable_residual_block.1} parent=5 // pred_check
      _
    $region10: #{depthwise_separable_residual_block.1} parent=5 // pred_check_branch
      %182 = sbr.rel (%p179) target = $region12
    $region11: #{depthwise_separable_residual_block.1} parent=5 // pred_region
      %s183 = ssub.s32 %s12, 1
      // Predicated region
      $region13: #{depthwise_separable_residual_block.1} parent=11 // pred_check
        %p184 = pneg %p59
      $region14: #{depthwise_separable_residual_block.1} parent=11 // pred_check_branch
        %186 = sbr.rel (%p184) target = $region16
      $region15: #{depthwise_separable_residual_block.1} parent=11 // pred_region
        _
      $region16: #{depthwise_separable_residual_block.1} parent=11 // pred_fallthru
        _
      // Predicated region
      $region17: #{depthwise_separable_residual_block.1} parent=11 // pred_check
        %p187 = pneg %p80
      $region18: #{depthwise_separable_residual_block.1} parent=11 // pred_check_branch
        %189 = sbr.rel (%p187) target = $region20
      $region19: #{depthwise_separable_residual_block.1} parent=11 // pred_region
        _
      $region20: #{depthwise_separable_residual_block.1} parent=11 // pred_fallthru
        _
      // Predicated region
      $region21: #{depthwise_separable_residual_block.1} parent=11 // pred_check
        %p190 = pneg %p101
      $region22: #{depthwise_separable_residual_block.1} parent=11 // pred_check_branch
        %192 = sbr.rel (%p190) target = $region24
      $region23: #{depthwise_separable_residual_block.1} parent=11 // pred_region
        _
      $region24: #{depthwise_separable_residual_block.1} parent=11 // pred_fallthru
        _
      // Predicated region
      $region25: #{depthwise_separable_residual_block.1} parent=11 // pred_check
        %p193 = pneg %p122
      $region26: #{depthwise_separable_residual_block.1} parent=11 // pred_check_branch
        %195 = sbr.rel (%p193) target = $region28
      $region27: #{depthwise_separable_residual_block.1} parent=11 // pred_region
        _
      $region28: #{depthwise_separable_residual_block.1} parent=11 // pred_fallthru
        _
      // Predicated region
      $region29: #{depthwise_separable_residual_block.1} parent=11 // pred_check
        %p196 = pneg %p143
      $region30: #{depthwise_separable_residual_block.1} parent=11 // pred_check_branch
        %198 = sbr.rel (%p196) target = $region32
      $region31: #{depthwise_separable_residual_block.1} parent=11 // pred_region
        _
      $region32: #{depthwise_separable_residual_block.1} parent=11 // pred_fallthru
        _
    $region12: #{depthwise_separable_residual_block.1} parent=5 // pred_fallthru
      _
    %p199 = scmp.lt.s32.totalorder %s12, 2
    // Predicated region
    $region33: #{depthwise_separable_residual_block.1} parent=5 // pred_check
      %p200 = pneg %p199
    $region34: #{depthwise_separable_residual_block.1} parent=5 // pred_check_branch
      %202 = sbr.rel (%p200) target = $region36
    $region35: #{depthwise_separable_residual_block.1} parent=5 // pred_region
      // Predicated region
      $region37: #{depthwise_separable_residual_block.1} parent=35 // pred_check
        %p203 = pneg %p32
      $region38: #{depthwise_separable_residual_block.1} parent=35 // pred_check_branch
        %205 = sbr.rel (%p203) target = $region40
      $region39: #{depthwise_separable_residual_block.1} parent=35 // pred_region
        %p206 = scmp.lt.s32.totalorder %s12, 1
        %s207 = scalar_select %p206, %s12, 1
        %s208 = smul.addr %s207, 3
        %s209 = smul.addr %s208, 4
        %s210 = scalar_lea.vmem %s0, %s209
      $region40: #{depthwise_separable_residual_block.1} parent=35 // pred_fallthru
        _
    $region36: #{depthwise_separable_residual_block.1} parent=5 // pred_fallthru
      _
    %p211 = scmp.le.s32.totalorder 1, %s12
    %p212 = scmp.lt.s32.totalorder %s12, 3
    %p213 = pnand %p211, %p212
    %p214 = pneg %p213
    // Predicated region
    $region41: #{depthwise_separable_residual_block.1} parent=5 // pred_check
      _
    $region42: #{depthwise_separable_residual_block.1} parent=5 // pred_check_branch
      %216 = sbr.rel (%p213) target = $region44
    $region43: #{depthwise_separable_residual_block.1} parent=5 // pred_region
      %s217 = ssub.s32 %s12, 1
      %p218 = scmp.lt.s32.totalorder %s17, 1
      %s219 = scalar_select %p218, %s17, 1
      %s220 = smul.addr %s219, 3
      %s221 = smul.addr %s220, 4
      %s222 = scalar_lea.vmem %s0, %s221
      %p223 = pneg %p38
      %p224 = pneg %p35
      %p225 = pneg %p59
      %p226 = pneg %p56
      %p227 = pneg %p80
      %p228 = pneg %p77
      %p229 = pneg %p101
      %p230 = pneg %p98
      %p231 = pneg %p122
      %p232 = pneg %p119
      %p233 = pneg %p143
      %p234 = pneg %p140
      %p235 = pneg %p169
      %p236 = pneg %p166
      %p237 = scmp.lt.s32.totalorder %s17, 1
      %s238 = scalar_select %p237, %s17, 1
      %s239 = smul.addr %s238, 2
      %s240 = smul.addr %s239, 8
      %s241 = scalar_lea.vmem %s6, %s240
      %p242 = scmp.lt.s32.totalorder %s17, 1
      %s243 = scalar_select %p242, %s17, 1
      %s244 = smul.addr %s243, 3
      %s245 = smul.addr %s244, 4
      %s246 = scalar_lea.vmem %s0, %s245
      %p247 = scmp.lt.s32.totalorder %s17, 1
      %s248 = scalar_select %p247, %s17, 1
      %s249 = smul.addr %s248, 2
      %s250 = smul.addr %s249, 8
      %s251 = scalar_lea.vmem %s6, %s250
      %v252 = vld [vmem:[%s1] sm:$0x3]
      %vm253 = vcmp.ge.s32.totalorder %v252, 1
      %vm254 = vcmp.lt.s32.totalorder %v252, 15
      %v255 = vld [vmem:[%s246] sm:$0xff]
      %v256 = vsel %vm253, 1, 0
      %v257 = vperm.slane %v256, 0
      %v258 = vperm.slane %v256, 1
      %vm259 = vcmp.eq.s32.totalorder %v257, 1
      %vm260 = vcmp.eq.s32.totalorder %v258, 1
      %262 = vst [vmem:[#allocation1] ss:$2 sm:$0xff] %v255
      %v263 = vld.sshfl [vmem:[#allocation1] sm:$0xff pattern:$0x75316420]
      %v264 = vld.sshfl [vmem:[#allocation1 + $0x8] sm:$0xff pattern:$0x75316420]
      %v267 = vsel %vm259, %v263, 0.0
      %v268 = vsel %vm260, %v264, 0.0
      %v269 = vld [vmem:[%s246] sm:$0xff]
      %v270 = vld [vmem:[%s246 + $0x8] sm:$0xf]
      %v271 = vsel %vm254, 1, 0
      %v272 = vperm.slane %v271, 0
      %v273 = vperm.slane %v271, 1
      %vm274 = vcmp.eq.s32.totalorder %v272, 1
      %vm275 = vcmp.eq.s32.totalorder %v273, 1
      %278 = vst [vmem:[#allocation1] ss:$2 sm:$0xff] %v269
      %s279 = scalar_lea.vmem [#allocation1], 16
      %280 = vst [vmem:[%s279] ss:$2 sm:$0xff] %v270
      %v281 = vld.sshfl [vmem:[#allocation1] sm:$0xff pattern:$0x75316420]
      %v282 = vld.sshfl [vmem:[#allocation1 + $0x8] sm:$0xff pattern:$0x75316420]
      %v283 = vld.sshfl [vmem:[#allocation1 + $0x10] sm:$0xff pattern:$0x75316420]
      %284 = vrot.lane.b32.xlu0 %v281, 126
      %v285 = vpop.permute.xlu0 %284
      %286 = vrot.lane.b32.xlu0 %v282, 126
      %v287 = vpop.permute.xlu0 %286
      %288 = vrot.lane.b32.xlu0 %v283, 126
      %v289 = vpop.permute.xlu0 %288
      %vm290 = vcmask 1031168
      %v291 = vsel %vm290, %v285, %v287
      %v292 = vsel %vm290, %v287, %v289
      %v295 = vsel %vm274, %v291, 0.0
      %v296 = vsel %vm275, %v292, 0.0
      %v297 = vld [vmem:[%s246] sm:$0xff]
      %v298 = vld [vmem:[%s246 + $0x8] sm:$0xf]
      %301 = vst [vmem:[#allocation1] ss:$2 sm:$0xff] %v297
      %s302 = scalar_lea.vmem [#allocation1], 16
      %303 = vst [vmem:[%s302] ss:$2 sm:$0xff] %v298
      %v304 = vld.sshfl [vmem:[#allocation1] sm:$0xff pattern:$0x75316420]
      %v305 = vld.sshfl [vmem:[#allocation1 + $0x8] sm:$0xff pattern:$0x75316420]
      %v306 = vld.sshfl [vmem:[#allocation1 + $0x10] sm:$0xff pattern:$0x75316420]
      %307 = vrot.lane.b32.xlu0 %v304, 112
      %v308 = vpop.permute.xlu0 %307
      %309 = vrot.lane.b32.xlu0 %v305, 112
      %v310 = vpop.permute.xlu0 %309
      %311 = vrot.lane.b32.xlu0 %v306, 112
      %v312 = vpop.permute.xlu0 %311
      %vm313 = vcmask 916480
      %v314 = vsel %vm313, %v308, %v310
      %v315 = vsel %vm313, %v310, %v312
      %v318 = vsel %vm259, %v314, 0.0
      %v319 = vsel %vm260, %v315, 0.0
      %v320 = vld [vmem:[%s246] sm:$0xff]
      %v321 = vld [vmem:[%s246 + $0x8] sm:$0xf]
      %324 = vst [vmem:[#allocation1] ss:$2 sm:$0xff] %v320
      %s325 = scalar_lea.vmem [#allocation1], 16
      %326 = vst [vmem:[%s325] ss:$2 sm:$0xff] %v321
      %v327 = vld.sshfl [vmem:[#allocation1] sm:$0xff pattern:$0x75316420]
      %v328 = vld.sshfl [vmem:[#allocation1 + $0x8] sm:$0xff pattern:$0x75316420]
      %v329 = vld.sshfl [vmem:[#allocation1 + $0x10] sm:$0xff pattern:$0x75316420]
      %330 = vrot.lane.b32.xlu0 %v327, 110
      %v331 = vpop.permute.xlu0 %330
      %332 = vrot.lane.b32.xlu0 %v328, 110
      %v333 = vpop.permute.xlu0 %332
      %334 = vrot.lane.b32.xlu0 %v329, 110
      %v335 = vpop.permute.xlu0 %334
      %vm336 = vcmask 900096
      %v337 = vsel %vm336, %v331, %v333
      %v338 = vsel %vm336, %v333, %v335
      %v341 = vsel %vm274, %v337, 0.0
      %v342 = vsel %vm275, %v338, 0.0
      %v343 = vld [vmem:[%s246] sm:$0xff]
      %v344 = vld [vmem:[%s246 + $0x8] sm:$0xf]
      %347 = vst [vmem:[#allocation1] ss:$2 sm:$0xff] %v343
      %s348 = scalar_lea.vmem [#allocation1], 16
      %349 = vst [vmem:[%s348] ss:$2 sm:$0xff] %v344
      %v350 = vld.sshfl [vmem:[#allocation1] sm:$0xff pattern:$0x75316420]
      %v351 = vld.sshfl [vmem:[#allocation1 + $0x8] sm:$0xff pattern:$0x75316420]
      %v352 = vld.sshfl [vmem:[#allocation1 + $0x10] sm:$0xff pattern:$0x75316420]
      %353 = vrot.lane.b32.xlu0 %v350, 96
      %v354 = vpop.permute.xlu0 %353
      %355 = vrot.lane.b32.xlu0 %v351, 96
      %v356 = vpop.permute.xlu0 %355
      %357 = vrot.lane.b32.xlu0 %v352, 96
      %v358 = vpop.permute.xlu0 %357
      %vm359 = vcmask 785408
      %v360 = vsel %vm359, %v354, %v356
      %v361 = vsel %vm359, %v356, %v358
      %v364 = vsel %vm259, %v360, 0.0
      %v365 = vsel %vm260, %v361, 0.0
      %v366 = vld [vmem:[%s246] sm:$0xff]
      %v367 = vld [vmem:[%s246 + $0x8] sm:$0xf]
      %370 = vst [vmem:[#allocation1] ss:$2 sm:$0xff] %v366
      %s371 = scalar_lea.vmem [#allocation1], 16
      %372 = vst [vmem:[%s371] ss:$2 sm:$0xff] %v367
      %v373 = vld.sshfl [vmem:[#allocation1] sm:$0xff pattern:$0x75316420]
      %v374 = vld.sshfl [vmem:[#allocation1 + $0x8] sm:$0xff pattern:$0x75316420]
      %v375 = vld.sshfl [vmem:[#allocation1 + $0x10] sm:$0xff pattern:$0x75316420]
      %376 = vrot.lane.b32.xlu0 %v373, 94
      %v377 = vpop.permute.xlu0 %376
      %378 = vrot.lane.b32.xlu0 %v374, 94
      %v379 = vpop.permute.xlu0 %378
      %380 = vrot.lane.b32.xlu0 %v375, 94
      %v381 = vpop.permute.xlu0 %380
      %vm382 = vcmask 769024
      %v383 = vsel %vm382, %v377, %v379
      %v384 = vsel %vm382, %v379, %v381
      %v387 = vsel %vm274, %v383, 0.0
      %v388 = vsel %vm275, %v384, 0.0
      %s389 = scalar_lea.vmem [#allocation1], 1
      %390 = vst [vmem:[%s389] ss:$2 sm:$0xff] %v269
      %s391 = scalar_lea.vmem [#allocation1], 17
      %392 = vst [vmem:[%s391] ss:$2 sm:$0xff] %v270
      %v393 = vld.sshfl [vmem:[#allocation1] sm:$0xff pattern:$0x75316420]
      %v394 = vld.sshfl [vmem:[#allocation1 + $0x8] sm:$0xff pattern:$0x75316420]
      %v395 = vld.sshfl [vmem:[#allocation1 + $0x10] sm:$0xff pattern:$0x75316420]
      %396 = vrot.lane.b32.xlu0 %v393, 127
      %v397 = vpop.permute.xlu0 %396
      %398 = vrot.lane.b32.xlu0 %v394, 127
      %v399 = vpop.permute.xlu0 %398
      %400 = vrot.lane.b32.xlu0 %v395, 127
      %v401 = vpop.permute.xlu0 %400
      %vm402 = vcmask 1039360
      %v403 = vsel %vm402, %v397, %v399
      %v404 = vsel %vm402, %v399, %v401
      %v409 = vrot.slane %v318, 4
      %v410 = vrot.slane %v319, 4
      %413 = vst [vmem:[#allocation1] ss:$2 sm:$0xff] %v320
      %s414 = scalar_lea.vmem [#allocation1], 16
      %415 = vst [vmem:[%s414] ss:$2 sm:$0xff] %v321
      %v416 = vld.sshfl [vmem:[#allocation1] sm:$0xff pattern:$0x75316420]
      %v417 = vld.sshfl [vmem:[#allocation1 + $0x8] sm:$0xff pattern:$0x75316420]
      %v418 = vld.sshfl [vmem:[#allocation1 + $0x10] sm:$0xff pattern:$0x75316420]
      %419 = vrot.lane.b32.xlu0 %v416, 111
      %v420 = vpop.permute.xlu0 %419
      %421 = vrot.lane.b32.xlu0 %v417, 111
      %v422 = vpop.permute.xlu0 %421
      %423 = vrot.lane.b32.xlu0 %v418, 111
      %v424 = vpop.permute.xlu0 %423
      %vm425 = vcmask 908288
      %v426 = vsel %vm425, %v420, %v422
      %v427 = vsel %vm425, %v422, %v424
      %v432 = vrot.slane %v341, 4
      %v433 = vrot.slane %v342, 4
      %s436 = scalar_lea.vmem [#allocation1], 1
      %437 = vst [vmem:[%s436] ss:$2 sm:$0xff] %v366
      %s438 = scalar_lea.vmem [#allocation1], 17
      %439 = vst [vmem:[%s438] ss:$2 sm:$0xff] %v367
      %v440 = vld.sshfl [vmem:[#allocation1] sm:$0xff pattern:$0x75316420]
      %v441 = vld.sshfl [vmem:[#allocation1 + $0x8] sm:$0xff pattern:$0x75316420]
      %v442 = vld.sshfl [vmem:[#allocation1 + $0x10] sm:$0xff pattern:$0x75316420]
      %443 = vrot.lane.b32.xlu0 %v440, 95
      %v444 = vpop.permute.xlu0 %443
      %445 = vrot.lane.b32.xlu0 %v441, 95
      %v446 = vpop.permute.xlu0 %445
      %447 = vrot.lane.b32.xlu0 %v442, 95
      %v448 = vpop.permute.xlu0 %447
      %vm449 = vcmask 777216
      %v450 = vsel %vm449, %v444, %v446
      %v451 = vsel %vm449, %v446, %v448
      %vm454 = vcmask 1043456
      %v455 = vsel %vm454, %v267, %v403
      %v456 = vsel %vm454, %v268, %v404
      %v457 = vsel %vm454, %v295, %v409
      %v458 = vsel %vm454, %v296, %v410
      %v459 = vsel %vm454, %v426, %v432
      %v460 = vsel %vm454, %v427, %v433
      %v461 = vsel %vm454, %v364, %v450
      %v462 = vsel %vm454, %v365, %v451
      %v463 = vld [vmem:[%s2] sm:$0xff]
      %v464 = vld [vmem:[%s2 + $0x8] sm:$0xff]
      %vm465 = vcmask 293888
      %v467 = vsel %vm465, %v463, 0
      %v470 = vsel %vm465, %v464, 0
      %v473 = vsel %vm454, %v387, 0
      %v476 = vsel %vm454, %v388, 0
      %478 = vmatpush.msra.mxu0 0.0
      %479 = vmatpush.msra.mxu0 0.0
      %480 = vmatpush.msra.mxu0 0.0
      %481 = vmatpush.msra.mxu0 0.0
      %482 = vmatpush.msra.mxu0 0.0
      %483 = vmatpush.msra.mxu0 0.0
      %484 = vmatpush.msra.mxu0 0.0
      %485 = vmatpush.msra.mxu0 0.0
      %486 = vmatpush.msra.mxu0 0.0
      %487 = vmatpush.msra.mxu0 0.0
      %488 = vmatpush.msra.mxu0 0.0
      %489 = vmatpush.msra.mxu0 %v473
      %490 = vmatpush.msra.mxu0 %v461
      %491 = vmatpush.msra.mxu0 %v459
      %492 = vmatpush.msra.mxu0 %v457
      %493 = vmatpush.msra.mxu0 %v455
      %494 = vmatmul.f32.gmra.mxu0 %v467
      %v495 = vpop.f32.mrf.mxu0
      %v496 = vadd.f32 0.0, %v495
      %497 = vmatmul.f32.gmra.mxu0 %v470
      %v498 = vpop.f32.mrf.mxu0
      %v499 = vadd.f32 0.0, %v498
      %500 = vdwg.mxu0
      %501 = vmatpush.msra.mxu0 0.0
      %502 = vmatpush.msra.mxu0 0.0
      %503 = vmatpush.msra.mxu0 0.0
      %504 = vmatpush.msra.mxu0 0.0
      %505 = vmatpush.msra.mxu0 0.0
      %506 = vmatpush.msra.mxu0 0.0
      %507 = vmatpush.msra.mxu0 0.0
      %508 = vmatpush.msra.mxu0 0.0
      %509 = vmatpush.msra.mxu0 0.0
      %510 = vmatpush.msra.mxu0 0.0
      %511 = vmatpush.msra.mxu0 0.0
      %512 = vmatpush.msra.mxu0 %v476
      %513 = vmatpush.msra.mxu0 %v462
      %514 = vmatpush.msra.mxu0 %v460
      %515 = vmatpush.msra.mxu0 %v458
      %516 = vmatpush.msra.mxu0 %v456
      %517 = vmatmul.f32.gmra.mxu0 %v467
      %v518 = vpop.f32.mrf.mxu0
      %v519 = vadd.f32 0.0, %v518
      %520 = vmatmul.f32.gmra.mxu0 %v470
      %v521 = vpop.f32.mrf.mxu0
      %v522 = vadd.f32 0.0, %v521
      %523 = vdwg.mxu0
      %v524 = vld [vmem:[%s3] sm:$0xff]
      %526 = vset.pattern.permute.xlu0 0
      %527 = vperm.xlu0 %526, %v524
      %v528 = vpop.permute.xlu0 %527
      %v530 = vadd.f32 %v496, %v528
      %v531 = vadd.f32 %v519, %v528
      %v532 = vmax.f32 %v530, 0.0
      %v533 = vmax.f32 %v531, 0.0
      %vm534 = vcmask 138240
      %535 = vst.msk [vmem:[#allocation2] sm:$0xff] %vm534, 0.0
      %vm536 = vcmask 277640
      %537 = vst.msk [vmem:[#allocation2 + $0x10] sm:$0xff] %vm536, 0.0
      %540 = vrot.lane.b32.xlu0 %v532, 17
      %v541 = vpop.permute.xlu0 %540
      %542 = vrot.lane.b32.xlu0 %v533, 17
      %v543 = vpop.permute.xlu0 %542
      %v544 = vsel %vm534, %v541, %v543
      %vm548 = vcmask 1047688
      %549 = vst.msk [vmem:[#allocation2] sm:$0xff] %vm548, %v541
      %550 = vst [vmem:[#allocation2 + $0x8] sm:$0xff] %v544
      %551 = vst.msk [vmem:[#allocation2 + $0x10] sm:$0xff] %vm534, %v543
      %v552 = vld [vmem:[#allocation2] sm:$0xff]
      %v553 = vld [vmem:[#allocation2 + $0x8] sm:$0xff]
      %v554 = vsel %vm259, %v552, 0.0
      %v555 = vsel %vm260, %v553, 0.0
      %v556 = vld [vmem:[#allocation2 + $0x10] sm:$0xff]
      %560 = vrot.lane.b32.xlu0 %v552, 126
      %v561 = vpop.permute.xlu0 %560
      %562 = vrot.lane.b32.xlu0 %v553, 126
      %v563 = vpop.permute.xlu0 %562
      %564 = vrot.lane.b32.xlu0 %v556, 126
      %v565 = vpop.permute.xlu0 %564
      %v566 = vsel %vm290, %v561, %v563
      %v567 = vsel %vm290, %v563, %v565
      %v570 = vsel %vm274, %v566, 0.0
      %v571 = vsel %vm275, %v567, 0.0
      %572 = vrot.lane.b32.xlu0 %v552, 112
      %v573 = vpop.permute.xlu0 %572
      %574 = vrot.lane.b32.xlu0 %v553, 112
      %v575 = vpop.permute.xlu0 %574
      %576 = vrot.lane.b32.xlu0 %v556, 112
      %v577 = vpop.permute.xlu0 %576
      %v578 = vsel %vm313, %v573, %v575
      %v579 = vsel %vm313, %v575, %v577
      %v582 = vsel %vm259, %v578, 0.0
      %v583 = vsel %vm260, %v579, 0.0
      %584 = vrot.lane.b32.xlu0 %v552, 110
      %v585 = vpop.permute.xlu0 %584
      %586 = vrot.lane.b32.xlu0 %v553, 110
      %v587 = vpop.permute.xlu0 %586
      %588 = vrot.lane.b32.xlu0 %v556, 110
      %v589 = vpop.permute.xlu0 %588
      %v590 = vsel %vm336, %v585, %v587
      %v591 = vsel %vm336, %v587, %v589
      %v594 = vsel %vm274, %v590, 0.0
      %v595 = vsel %vm275, %v591, 0.0
      %596 = vrot.lane.b32.xlu0 %v552, 96
      %v597 = vpop.permute.xlu0 %596
      %598 = vrot.lane.b32.xlu0 %v553, 96
      %v599 = vpop.permute.xlu0 %598
      %600 = vrot.lane.b32.xlu0 %v556, 96
      %v601 = vpop.permute.xlu0 %600
      %v602 = vsel %vm359, %v597, %v599
      %v603 = vsel %vm359, %v599, %v601
      %v606 = vsel %vm259, %v602, 0.0
      %v607 = vsel %vm260, %v603, 0.0
      %608 = vrot.lane.b32.xlu0 %v552, 94
      %v609 = vpop.permute.xlu0 %608
      %610 = vrot.lane.b32.xlu0 %v553, 94
      %v611 = vpop.permute.xlu0 %610
      %612 = vrot.lane.b32.xlu0 %v556, 94
      %v613 = vpop.permute.xlu0 %612
      %v614 = vsel %vm382, %v609, %v611
      %v615 = vsel %vm382, %v611, %v613
      %v618 = vsel %vm274, %v614, 0.0
      %v619 = vsel %vm275, %v615, 0.0
      %620 = vrot.lane.b32.xlu0 %v552, 127
      %v621 = vpop.permute.xlu0 %620
      %622 = vrot.lane.b32.xlu0 %v553, 127
      %v623 = vpop.permute.xlu0 %622
      %624 = vrot.lane.b32.xlu0 %v556, 127
      %v625 = vpop.permute.xlu0 %624
      %v626 = vsel %vm402, %v621, %v623
      %v627 = vsel %vm402, %v623, %v625
      %630 = vrot.lane.b32.xlu0 %v552, 111
      %v631 = vpop.permute.xlu0 %630
      %632 = vrot.lane.b32.xlu0 %v553, 111
      %v633 = vpop.permute.xlu0 %632
      %634 = vrot.lane.b32.xlu0 %v556, 111
      %v635 = vpop.permute.xlu0 %634
      %v636 = vsel %vm425, %v631, %v633
      %v637 = vsel %vm425, %v633, %v635
      %640 = vrot.lane.b32.xlu0 %v552, 95
      %v641 = vpop.permute.xlu0 %640
      %642 = vrot.lane.b32.xlu0 %v553, 95
      %v643 = vpop.permute.xlu0 %642
      %644 = vrot.lane.b32.xlu0 %v556, 95
      %v645 = vpop.permute.xlu0 %644
      %v646 = vsel %vm449, %v641, %v643
      %v647 = vsel %vm449, %v643, %v645
      %v650 = vld [vmem:[%s4] sm:$0xff]
      %v651 = vld [vmem:[%s5] sm:$0xff]
      %653 = vset.pattern.permute.xlu0 0
      %654 = vperm.xlu0 %653, %v651
      %v655 = vpop.permute.xlu0 %654
      %vm657 = vcmask 588800
      %v659 = vsel %vm657, %v650, 0
      %661 = vmatpush.msra.mxu0 0.0
      %662 = vmatpush.msra.mxu0 0.0
      %663 = vmatpush.msra.mxu0 0.0
      %664 = vmatpush.msra.mxu0 0.0
      %665 = vmatpush.msra.mxu0 0.0
      %666 = vmatpush.msra.mxu0 0.0
      %667 = vmatpush.msra.mxu0 0.0
      %668 = vmatpush.msra.mxu0 %v618
      %669 = vmatpush.msra.mxu0 %v646
      %670 = vmatpush.msra.mxu0 %v606
      %671 = vmatpush.msra.mxu0 %v594
      %672 = vmatpush.msra.mxu0 %v636
      %673 = vmatpush.msra.mxu0 %v582
      %674 = vmatpush.msra.mxu0 %v570
      %675 = vmatpush.msra.mxu0 %v626
      %676 = vmatpush.msra.mxu0 %v554
      %677 = vmatmul.f32.gmra.mxu0 %v659
      %v678 = vpop.f32.mrf.mxu0
      %v679 = vadd.f32 %v655, %v678
      %680 = vdwg.mxu0
      %681 = vmatpush.msra.mxu0 0.0
      %682 = vmatpush.msra.mxu0 0.0
      %683 = vmatpush.msra.mxu0 0.0
      %684 = vmatpush.msra.mxu0 0.0
      %685 = vmatpush.msra.mxu0 0.0
      %686 = vmatpush.msra.mxu0 0.0
      %687 = vmatpush.msra.mxu0 0.0
      %688 = vmatpush.msra.mxu0 %v619
      %689 = vmatpush.msra.mxu0 %v647
      %690 = vmatpush.msra.mxu0 %v607
      %691 = vmatpush.msra.mxu0 %v595
      %692 = vmatpush.msra.mxu0 %v637
      %693 = vmatpush.msra.mxu0 %v583
      %694 = vmatpush.msra.mxu0 %v571
      %695 = vmatpush.msra.mxu0 %v627
      %696 = vmatpush.msra.mxu0 %v555
      %697 = vmatmul.f32.gmra.mxu0 %v659
      %v698 = vpop.f32.mrf.mxu0
      %v699 = vadd.f32 %v655, %v698
      %700 = vdwg.mxu0
      %v701 = vadd.f32 %v679, %v499
      %v702 = vadd.f32 %v699, %v522
      %v703 = vmax.f32 %v701, 0.0
      %v704 = vmax.f32 %v702, 0.0
      %705 = vst [vmem:[%s251] sm:$0xff] %v703
      %706 = vst [vmem:[%s251 + $0x8] sm:$0xff] %v704
      %p707 = scmp.lt.s32.totalorder %s17, 1
      %s708 = scalar_select %p707, %s17, 1
      %s709 = smul.addr %s708, 2
      %s710 = smul.addr %s709, 8
      %s711 = scalar_lea.vmem %s6, %s710
      // Predicated region
      $region45: #{depthwise_separable_residual_block.1} parent=43 // pred_check
        %p712 = pneg %p166
      $region46: #{depthwise_separable_residual_block.1} parent=43 // pred_check_branch
        %714 = sbr.rel (%p712) target = $region48
      $region47: #{depthwise_separable_residual_block.1} parent=43 // pred_region
        _
      $region48: #{depthwise_separable_residual_block.1} parent=43 // pred_fallthru
        _
    $region44: #{depthwise_separable_residual_block.1} parent=5 // pred_fallthru
      _
    %p715 = scmp.le.s32.totalorder 2, %s12
    // Predicated region
    $region49: #{depthwise_separable_residual_block.1} parent=5 // pred_check
      %p716 = pneg %p715
    $region50: #{depthwise_separable_residual_block.1} parent=5 // pred_check_branch
      %718 = sbr.rel (%p716) target = $region52
    $region51: #{depthwise_separable_residual_block.1} parent=5 // pred_region
      %s719 = ssub.s32 %s12, 2
      // Predicated region
      $region53: #{depthwise_separable_residual_block.1} parent=51 // pred_check
        %p720 = pneg %p172
      $region54: #{depthwise_separable_residual_block.1} parent=51 // pred_check_branch
        %722 = sbr.rel (%p720) target = $region56
      $region55: #{depthwise_separable_residual_block.1} parent=51 // pred_region
        %p723 = scmp.lt.s32.totalorder %s18, 1
        %s724 = scalar_select %p723, %s18, 1
        %s725 = smul.addr %s724, 2
        %s726 = smul.addr %s725, 8
        %s727 = scalar_lea.vmem %s6, %s726
      $region56: #{depthwise_separable_residual_block.1} parent=51 // pred_fallthru
        _
    $region52: #{depthwise_separable_residual_block.1} parent=5 // pred_fallthru
      _
  $region6: #{depthwise_separable_residual_block.1} parent=0 // loop_footer
    %s16 = sadd.s32 1, %s12
  $region7: #{depthwise_separable_residual_block.1} parent=0 // loop_footer_branch
    %11 = sbr.rel target = $region3
  $region8: #{depthwise_separable_residual_block.1} parent=0 // loop_exit
    _

</llo_original>
